<compile_context>
chip_gen: v7x
topology: tpu7x:2x2x1
jax: 0.10.0
libtpu: 0.0.40
codegen_flags: <defaults>
</compile_context>

<pallas_src>
import functools

import jax
import jax.numpy as jnp
from jax.experimental import pallas as pl
from jax.experimental.pallas import tpu as pltpu


# Budget for keeping the whole MLP (weights + tiles + activation temps)
# resident in VMEM.  2x this (double-buffer headroom) stays under ~48 MiB,
# which is safe on v7x (64 MiB physical) and trivially safe on v5e/v6e.
_FUSED_VMEM_BUDGET = 20 << 20


def _sigmoid_f32(y):
    # exp already lands on the EUP; route the divide there too (approx vrcp)
    # instead of a VPU f32 divide, so the activation epilogue hides under the
    # MXU/DMA instead of adding VALU bundles.
    return pl.reciprocal(1.0 + jnp.exp(-y), approx=True)


# --------------------------------------------------------------------------
# Whole-MLP fused kernel: grid over M only, all weights resident in VMEM.
# --------------------------------------------------------------------------
def _mlp_fused_kernel(x_ref, *refs, num_hidden):
    # refs = [wT_0, scale_0, shift_0, ..., wT_{H-1}, scale_{H-1}, shift_{H-1},
    #         wT_last, b_last, o_ref]
    o_ref = refs[-1]
    h = x_ref[...].astype(jnp.float32)
    idx = 0
    for _ in range(num_hidden):
        w_t = refs[idx][...]
        scale = refs[idx + 1][...]
        shift = refs[idx + 2][...]
        idx += 3
        y = jnp.dot(h, w_t, preferred_element_type=jnp.float32)
        y = y * scale + shift          # Linear bias + eval-mode BN, pre-folded
        h = _sigmoid_f32(y)
    y = jnp.dot(h, refs[idx][...], preferred_element_type=jnp.float32)
    y = y + refs[idx + 1][...]         # output-layer bias
    o_ref[...] = y.astype(o_ref.dtype)


def _pick_tm(m):
    if m <= 256:
        return m                        # single M block (full dim is always legal)
    # keep >= 2 M blocks for small-ish M so both v7x TensorCores get work
    return 128 if m < 2048 else 256


def _fused_vmem_bytes(tm, k0, layer_dims):
    b = 4  # f32
    total = 2 * tm * k0 * b + 2 * tm * layer_dims[-1] * b  # x / out tiles (2-buf)
    k = k0
    for n in layer_dims:
        total += (k * n + 2 * n + tm * n) * b  # resident weight + vectors + act temp
        k = n
    return total


def mlp_forward_fused(x, prepared, *, tm, vmem_needed):
    m, k0 = x.shape
    num_hidden = len(prepared) - 1
    n_out = prepared[-1]["wT"].shape[1]
    grid_m = pl.cdiv(m, tm)

    const = lambda i: (0, 0)            # weights/vectors: DMA'd once, VMEM-resident
    operands = [x]
    in_specs = [pl.BlockSpec((tm, k0), lambda i: (i, 0))]
    for p in prepared[:-1]:
        kd, nd = p["wT"].shape
        operands += [p["wT"], p["scale"], p["shift"]]
        in_specs += [pl.BlockSpec((kd, nd), const),
                     pl.BlockSpec((1, nd), const),
                     pl.BlockSpec((1, nd), const)]
    kd, nd = prepared[-1]["wT"].shape
    operands += [prepared[-1]["wT"], prepared[-1]["b"]]
    in_specs += [pl.BlockSpec((kd, nd), const),
                 pl.BlockSpec((1, nd), const)]

    vmem_limit = int(min(48 << 20, max(16 << 20, 2 * vmem_needed + (2 << 20))))

    kernel = functools.partial(_mlp_fused_kernel, num_hidden=num_hidden)
    return pl.pallas_call(
        kernel,
        out_shape=jax.ShapeDtypeStruct((m, n_out), x.dtype),
        grid_spec=pltpu.PrefetchScalarGridSpec(
            num_scalar_prefetch=0,
            grid=(grid_m,),
            in_specs=in_specs,
            out_specs=pl.BlockSpec((tm, n_out), lambda i: (i, 0)),
        ),
        compiler_params=pltpu.CompilerParams(
            dimension_semantics=("parallel",),
            vmem_limit_bytes=vmem_limit,
        ),
    )(*operands)


# --------------------------------------------------------------------------
# Per-layer fused fallback (used only when the whole model does not fit VMEM).
# Whole-K blocks when K fits; otherwise K-grid accumulation directly into the
# f32 output ref (no accumulator scratch).
# --------------------------------------------------------------------------
def _layer_kernel(x_ref, wt_ref, *rest, apply_sigmoid, apply_affine, single_k):
    if apply_affine:
        scale_ref, shift_ref, o_ref = rest
    else:
        bias_ref, o_ref = rest

    def epilogue(y):
        if apply_affine:
            y = y * scale_ref[...] + shift_ref[...]
        else:
            y = y + bias_ref[...]
        if apply_sigmoid:
            y = _sigmoid_f32(y)
        return y

    if single_k:
        y = jnp.dot(x_ref[...], wt_ref[...], preferred_element_type=jnp.float32)
        o_ref[...] = epilogue(y).astype(o_ref.dtype)
    else:
        k = pl.program_id(2)

        @pl.when(k == 0)
        def _():
            o_ref[...] = jnp.zeros_like(o_ref)

        o_ref[...] += jnp.dot(x_ref[...], wt_ref[...],
                              preferred_element_type=jnp.float32)

        @pl.when(k == pl.num_programs(2) - 1)
        def _():
            o_ref[...] = epilogue(o_ref[...]).astype(o_ref.dtype)


def fused_linear_layer(x, w_t, scale, shift, *, apply_sigmoid, apply_affine,
                       tm_pref=256, tn_pref=512, tk_pref=1024):
    m, k = x.shape
    kw, n = w_t.shape
    assert k == kw, (k, kw)

    tm = m if m <= tm_pref else (128 if m < 2048 else tm_pref)
    tn = n if n <= tn_pref else tn_pref   # multiple of 128; M/N edges are masked
    # Reduction axis: never mask a partial K block (padding would pollute valid
    # outputs).  Whole K when it fits; else the largest pow2-of-128 divisor.
    if k <= tk_pref:
        tk = k
    else:
        tk = next((t for t in (1024, 512, 256, 128) if k % t == 0), k)
    grid_k = k // tk
    single_k = grid_k == 1

    operands = [x, w_t]
    in_specs = [pl.BlockSpec((tm, tk), lambda i, j, kk: (i, kk)),
                pl.BlockSpec((tk, tn), lambda i, j, kk: (kk, j))]
    if apply_affine:
        operands += [scale, shift]
        in_specs += [pl.BlockSpec((1, tn), lambda i, j, kk: (0, j)),
                     pl.BlockSpec((1, tn), lambda i, j, kk: (0, j))]
    else:
        operands += [shift]               # shift holds the linear bias here
        in_specs += [pl.BlockSpec((1, tn), lambda i, j, kk: (0, j))]

    kernel = functools.partial(_layer_kernel, apply_sigmoid=apply_sigmoid,
                               apply_affine=apply_affine, single_k=single_k)
    return pl.pallas_call(
        kernel,
        out_shape=jax.ShapeDtypeStruct((m, n), x.dtype),
        grid_spec=pltpu.PrefetchScalarGridSpec(
            num_scalar_prefetch=0,
            grid=(pl.cdiv(m, tm), pl.cdiv(n, tn), grid_k),
            in_specs=in_specs,
            out_specs=pl.BlockSpec((tm, tn), lambda i, j, kk: (i, j)),
        ),
        compiler_params=pltpu.CompilerParams(
            dimension_semantics=("parallel", "parallel", "arbitrary"),
        ),
    )(*operands)


def mlp_forward_per_layer(x, prepared):
    h = x
    for p in prepared[:-1]:
        h = fused_linear_layer(h, p["wT"], p["scale"], p["shift"],
                               apply_sigmoid=True, apply_affine=True)
    last = prepared[-1]
    return fused_linear_layer(h, last["wT"], None, last["b"],
                              apply_sigmoid=False, apply_affine=False)


# --------------------------------------------------------------------------
# Parameter handling + dispatch
# --------------------------------------------------------------------------
def init_mlp_params(key, input_size, output_size, num_hidden_layers):
    """Parameters mirroring the PyTorch module (Linear weights in (out, in))."""
    params = []
    in_features = input_size
    step_size = (output_size - input_size) / (num_hidden_layers + 1)
    for _ in range(num_hidden_layers):
        out_features = int(in_features + step_size)
        key, kw, kb, kg, kbe, km, kv = jax.random.split(key, 7)
        bound = 1.0 / (in_features ** 0.5)
        w = jax.random.uniform(kw, (out_features, in_features), jnp.float32,
                               -bound, bound)
        b = jax.random.uniform(kb, (out_features,), jnp.float32, -bound, bound)
        gamma = jax.random.uniform(kg, (out_features,), jnp.float32, 0.5, 1.5)
        beta = 0.1 * jax.random.normal(kbe, (out_features,), jnp.float32)
        mean = 0.1 * jax.random.normal(km, (out_features,), jnp.float32)
        var = jax.random.uniform(kv, (out_features,), jnp.float32, 0.5, 1.5)
        params.append(dict(w=w, b=b, gamma=gamma, beta=beta, mean=mean, var=var))
        in_features = out_features
    key, kw, kb = jax.random.split(key, 3)
    bound = 1.0 / (in_features ** 0.5)
    w = jax.random.uniform(kw, (output_size, in_features), jnp.float32,
                           -bound, bound)
    b = jax.random.uniform(kb, (output_size,), jnp.float32, -bound, bound)
    params.append(dict(w=w, b=b))
    return params


def prepare_mlp_params(params, eps=1e-5):
    """One-time fold: pre-transpose weights to (K, N), fold Linear bias + BN."""
    prepared = []
    for layer in params[:-1]:
        scale = layer["gamma"] * jax.lax.rsqrt(layer["var"] + eps)
        shift = layer["beta"] + (layer["b"] - layer["mean"]) * scale
        prepared.append(dict(
            wT=jnp.asarray(layer["w"].T, jnp.float32),
            scale=scale.reshape(1, -1).astype(jnp.float32),
            shift=shift.reshape(1, -1).astype(jnp.float32)))
    last = params[-1]
    prepared.append(dict(
        wT=jnp.asarray(last["w"].T, jnp.float32),
        b=last["b"].reshape(1, -1).astype(jnp.float32)))
    return prepared


def mlp_forward(x, prepared, *, force_per_layer=False):
    """Eval-mode MLP forward.  Single fused pallas_call when the model fits in
    VMEM (the common case for MLPs); per-layer fused kernels otherwise."""
    m, k0 = x.shape
    tm = _pick_tm(m)
    layer_dims = [p["wT"].shape[1] for p in prepared]
    vmem_needed = _fused_vmem_bytes(tm, k0, layer_dims)
    if force_per_layer or vmem_needed > _FUSED_VMEM_BUDGET:
        return mlp_forward_per_layer(x, prepared)
    return mlp_forward_fused(x, prepared, tm=tm, vmem_needed=vmem_needed)


def mlp_reference(x, params, eps=1e-5):
    """Pure-JAX reference of the same eval-mode forward."""
    h = x
    for layer in params[:-1]:
        y = jnp.dot(h, layer["w"].T, precision=jax.lax.Precision.HIGHEST) + layer["b"]
        y = (y - layer["mean"]) * jax.lax.rsqrt(layer["var"] + eps) * layer["gamma"] \
            + layer["beta"]
        h = 1.0 / (1.0 + jnp.exp(-y))
    last = params[-1]
    return jnp.dot(h, last["w"].T, precision=jax.lax.Precision.HIGHEST) + last["b"]


if __name__ == "__main__":
    key = jax.random.PRNGKey(0)
    kx, kp = jax.random.split(key)

    batch = 16
    input_size = 32
    output_size = 8
    num_hidden_layers = 2
    dropout_p = 0.1  # eval-mode forward: Dropout is the identity

    params = init_mlp_params(kp, input_size, output_size, num_hidden_layers)
    prepared = prepare_mlp_params(params)   # one-time transpose + bias/BN fold
    x = jax.random.normal(kx, (batch, input_size), dtype=jnp.float32)

    ref = mlp_reference(x, params)

    # Main path: whole-MLP single-kernel fusion.
    out = jax.block_until_ready(mlp_forward(x, prepared))
    assert out.shape == (batch, output_size), out.shape
    # approx-reciprocal sigmoid -> slightly relaxed tolerance vs exact reference
    assert jnp.allclose(out, ref, rtol=2e-3, atol=2e-3), (out, ref)

    # Also exercise the per-layer fused fallback path.
    out_fb = jax.block_until_ready(mlp_forward(x, prepared, force_per_layer=True))
    assert jnp.allclose(out_fb, ref, rtol=2e-3, atol=2e-3), (out_fb, ref)

    print("KERNEL_OK")
</pallas_src>

<mosaic_0001>
module attributes {stable_mosaic.version = 11 : i64} {
  func.func @_mlp_fused_kernel(%arg0: i32, %arg1: memref<16x32xf32, #tpu.memory_space<vmem>>, %arg2: memref<32x24xf32, #tpu.memory_space<vmem>>, %arg3: memref<1x24xf32, #tpu.memory_space<vmem>>, %arg4: memref<1x24xf32, #tpu.memory_space<vmem>>, %arg5: memref<24x16xf32, #tpu.memory_space<vmem>>, %arg6: memref<1x16xf32, #tpu.memory_space<vmem>>, %arg7: memref<1x16xf32, #tpu.memory_space<vmem>>, %arg8: memref<16x8xf32, #tpu.memory_space<vmem>>, %arg9: memref<1x8xf32, #tpu.memory_space<vmem>>, %arg10: memref<16x8xf32, #tpu.memory_space<vmem>>) attributes {dimension_semantics = [#tpu.dimension_semantics<parallel>], iteration_bounds = array<i64: 1>, scalar_prefetch = 0 : i64, scratch_operands = 0 : i64, tpu.core_type = #tpu.core_type<tc>, window_params = [{transform_indices = @transform_0, window_bounds = array<i64: 16, 32>}, {pipeline_mode = #tpu.pipeline_mode<synchronous>, transform_indices = @transform_1, window_bounds = array<i64: 32, 24>}, {pipeline_mode = #tpu.pipeline_mode<synchronous>, transform_indices = @transform_2, window_bounds = array<i64: 1, 24>}, {pipeline_mode = #tpu.pipeline_mode<synchronous>, transform_indices = @transform_3, window_bounds = array<i64: 1, 24>}, {pipeline_mode = #tpu.pipeline_mode<synchronous>, transform_indices = @transform_4, window_bounds = array<i64: 24, 16>}, {pipeline_mode = #tpu.pipeline_mode<synchronous>, transform_indices = @transform_5, window_bounds = array<i64: 1, 16>}, {pipeline_mode = #tpu.pipeline_mode<synchronous>, transform_indices = @transform_6, window_bounds = array<i64: 1, 16>}, {pipeline_mode = #tpu.pipeline_mode<synchronous>, transform_indices = @transform_7, window_bounds = array<i64: 16, 8>}, {pipeline_mode = #tpu.pipeline_mode<synchronous>, transform_indices = @transform_8, window_bounds = array<i64: 1, 8>}, {transform_indices = @transform_9, window_bounds = array<i64: 16, 8>}]} {
    %c0 = arith.constant 0 : index
    %c0_0 = arith.constant 0 : index
    %0 = vector.load %arg1[%c0, %c0_0] : memref<16x32xf32, #tpu.memory_space<vmem>>, vector<16x32xf32>
    %c0_1 = arith.constant 0 : index
    %c0_2 = arith.constant 0 : index
    %1 = vector.load %arg2[%c0_1, %c0_2] : memref<32x24xf32, #tpu.memory_space<vmem>>, vector<32x24xf32>
    %c0_3 = arith.constant 0 : index
    %c0_4 = arith.constant 0 : index
    %2 = vector.load %arg3[%c0_3, %c0_4] : memref<1x24xf32, #tpu.memory_space<vmem>>, vector<1x24xf32>
    %c0_5 = arith.constant 0 : index
    %c0_6 = arith.constant 0 : index
    %3 = vector.load %arg4[%c0_5, %c0_6] : memref<1x24xf32, #tpu.memory_space<vmem>>, vector<1x24xf32>
    %cst = arith.constant dense<0.000000e+00> : vector<16x24xf32>
    %4 = tpu.matmul %0, %1, %cst {dimension_numbers = #tpu.dot_dimension_numbers<[1], [0], [0], [1], [0, 0, 1, 1], [], []>} : vector<16x32xf32>, vector<32x24xf32>, vector<16x24xf32> -> vector<16x24xf32>
    %5 = vector.broadcast %2 : vector<1x24xf32> to vector<16x24xf32>
    %6 = arith.mulf %4, %5 : vector<16x24xf32>
    %7 = vector.broadcast %3 : vector<1x24xf32> to vector<16x24xf32>
    %8 = arith.addf %6, %7 : vector<16x24xf32>
    %cst_7 = arith.constant 0.000000e+00 : f32
    %9 = vector.broadcast %cst_7 : f32 to vector<16x24xf32>
    %10 = arith.subf %9, %8 : vector<16x24xf32>
    %11 = math.exp %10 : vector<16x24xf32>
    %cst_8 = arith.constant 1.000000e+00 : f32
    %12 = vector.broadcast %cst_8 : f32 to vector<16x24xf32>
    %13 = arith.addf %12, %11 : vector<16x24xf32>
    %14 = tpu.reciprocal %13 {approx = true} : vector<16x24xf32> -> vector<16x24xf32>
    %c0_9 = arith.constant 0 : index
    %c0_10 = arith.constant 0 : index
    %15 = vector.load %arg5[%c0_9, %c0_10] : memref<24x16xf32, #tpu.memory_space<vmem>>, vector<24x16xf32>
    %c0_11 = arith.constant 0 : index
    %c0_12 = arith.constant 0 : index
    %16 = vector.load %arg6[%c0_11, %c0_12] : memref<1x16xf32, #tpu.memory_space<vmem>>, vector<1x16xf32>
    %c0_13 = arith.constant 0 : index
    %c0_14 = arith.constant 0 : index
    %17 = vector.load %arg7[%c0_13, %c0_14] : memref<1x16xf32, #tpu.memory_space<vmem>>, vector<1x16xf32>
    %cst_15 = arith.constant dense<0.000000e+00> : vector<16x16xf32>
    %18 = tpu.matmul %14, %15, %cst_15 {dimension_numbers = #tpu.dot_dimension_numbers<[1], [0], [0], [1], [0, 0, 1, 1], [], []>} : vector<16x24xf32>, vector<24x16xf32>, vector<16x16xf32> -> vector<16x16xf32>
    %19 = vector.broadcast %16 : vector<1x16xf32> to vector<16x16xf32>
    %20 = arith.mulf %18, %19 : vector<16x16xf32>
    %21 = vector.broadcast %17 : vector<1x16xf32> to vector<16x16xf32>
    %22 = arith.addf %20, %21 : vector<16x16xf32>
    %cst_16 = arith.constant 0.000000e+00 : f32
    %23 = vector.broadcast %cst_16 : f32 to vector<16x16xf32>
    %24 = arith.subf %23, %22 : vector<16x16xf32>
    %25 = math.exp %24 : vector<16x16xf32>
    %cst_17 = arith.constant 1.000000e+00 : f32
    %26 = vector.broadcast %cst_17 : f32 to vector<16x16xf32>
    %27 = arith.addf %26, %25 : vector<16x16xf32>
    %28 = tpu.reciprocal %27 {approx = true} : vector<16x16xf32> -> vector<16x16xf32>
    %c0_18 = arith.constant 0 : index
    %c0_19 = arith.constant 0 : index
    %29 = vector.load %arg8[%c0_18, %c0_19] : memref<16x8xf32, #tpu.memory_space<vmem>>, vector<16x8xf32>
    %cst_20 = arith.constant dense<0.000000e+00> : vector<16x8xf32>
    %30 = tpu.matmul %28, %29, %cst_20 {dimension_numbers = #tpu.dot_dimension_numbers<[1], [0], [0], [1], [0, 0, 1, 1], [], []>} : vector<16x16xf32>, vector<16x8xf32>, vector<16x8xf32> -> vector<16x8xf32>
    %c0_21 = arith.constant 0 : index
    %c0_22 = arith.constant 0 : index
    %31 = vector.load %arg9[%c0_21, %c0_22] : memref<1x8xf32, #tpu.memory_space<vmem>>, vector<1x8xf32>
    %32 = vector.broadcast %31 : vector<1x8xf32> to vector<16x8xf32>
    %33 = arith.addf %30, %32 : vector<16x8xf32>
    %c0_23 = arith.constant 0 : index
    %c0_24 = arith.constant 0 : index
    %34 = vector.load %arg10[%c0_23, %c0_24] : memref<16x8xf32, #tpu.memory_space<vmem>>, vector<16x8xf32>
    tpu.vector_store %arg10[%c0_23, %c0_24], %33 {strides = array<i32>} : memref<16x8xf32, #tpu.memory_space<vmem>>, vector<16x8xf32>,
    return
  }
  func.func @transform_0(%arg0: i32) -> (i32, i32) {
    %c0_i32 = arith.constant 0 : i32
    %c0_i32_0 = arith.constant 0 : i32
    return %arg0, %c0_i32 : i32, i32
  }
  func.func @transform_1(%arg0: i32) -> (i32, i32) {
    %c0_i32 = arith.constant 0 : i32
    %c0_i32_0 = arith.constant 0 : i32
    %c0_i32_1 = arith.constant 0 : i32
    return %c0_i32, %c0_i32_0 : i32, i32
  }
  func.func @transform_2(%arg0: i32) -> (i32, i32) {
    %c0_i32 = arith.constant 0 : i32
    %c0_i32_0 = arith.constant 0 : i32
    %c0_i32_1 = arith.constant 0 : i32
    return %c0_i32, %c0_i32_0 : i32, i32
  }
  func.func @transform_3(%arg0: i32) -> (i32, i32) {
    %c0_i32 = arith.constant 0 : i32
    %c0_i32_0 = arith.constant 0 : i32
    %c0_i32_1 = arith.constant 0 : i32
    return %c0_i32, %c0_i32_0 : i32, i32
  }
  func.func @transform_4(%arg0: i32) -> (i32, i32) {
    %c0_i32 = arith.constant 0 : i32
    %c0_i32_0 = arith.constant 0 : i32
    %c0_i32_1 = arith.constant 0 : i32
    return %c0_i32, %c0_i32_0 : i32, i32
  }
  func.func @transform_5(%arg0: i32) -> (i32, i32) {
    %c0_i32 = arith.constant 0 : i32
    %c0_i32_0 = arith.constant 0 : i32
    %c0_i32_1 = arith.constant 0 : i32
    return %c0_i32, %c0_i32_0 : i32, i32
  }
  func.func @transform_6(%arg0: i32) -> (i32, i32) {
    %c0_i32 = arith.constant 0 : i32
    %c0_i32_0 = arith.constant 0 : i32
    %c0_i32_1 = arith.constant 0 : i32
    return %c0_i32, %c0_i32_0 : i32, i32
  }
  func.func @transform_7(%arg0: i32) -> (i32, i32) {
    %c0_i32 = arith.constant 0 : i32
    %c0_i32_0 = arith.constant 0 : i32
    %c0_i32_1 = arith.constant 0 : i32
    return %c0_i32, %c0_i32_0 : i32, i32
  }
  func.func @transform_8(%arg0: i32) -> (i32, i32) {
    %c0_i32 = arith.constant 0 : i32
    %c0_i32_0 = arith.constant 0 : i32
    %c0_i32_1 = arith.constant 0 : i32
    return %c0_i32, %c0_i32_0 : i32, i32
  }
  func.func @transform_9(%arg0: i32) -> (i32, i32) {
    %c0_i32 = arith.constant 0 : i32
    %c0_i32_0 = arith.constant 0 : i32
    return %arg0, %c0_i32 : i32, i32
  }
}

</mosaic_0001>

<llo_original>
// kernel: tpu_custom_call.1
$region0: #{tpu_custom_call.1}
  #allocation0 [shape = 'u32[]', space=smem, size = 0x4, offset = 0x4, fixed_abs, tag = 'smem constant byte address 0x4 - core index']
  #allocation1 [shape = 'u32[144,128]{1,0:T(1,128)}', space=vmem, size = 0x12000, scoped, tag = 'internal scratch']
  %s0 = inlined_call_operand.vmem [shape: f32[16,32], index: 0, kind: input, shape index: {}]
  %s1 = inlined_call_operand.vmem [shape: f32[32,24], index: 1, kind: input, shape index: {}]
  %s2 = inlined_call_operand.vmem [shape: f32[1,24], index: 2, kind: input, shape index: {}]
  %s3 = inlined_call_operand.vmem [shape: f32[1,24], index: 3, kind: input, shape index: {}]
  %s4 = inlined_call_operand.vmem [shape: f32[24,16], index: 4, kind: input, shape index: {}]
  %s5 = inlined_call_operand.vmem [shape: f32[1,16], index: 5, kind: input, shape index: {}]
  %s6 = inlined_call_operand.vmem [shape: f32[1,16], index: 6, kind: input, shape index: {}]
  %s7 = inlined_call_operand.vmem [shape: f32[16,8], index: 7, kind: input, shape index: {}]
  %s8 = inlined_call_operand.vmem [shape: f32[1,8], index: 8, kind: input, shape index: {}]
  %s9 = inlined_call_operand.vmem [shape: f32[16,8], index: 9, kind: output, shape index: {}]
  %s10 = sld [smem:[#allocation0]]
  $region46: #{tpu_custom_call.1} parent=0
    _
  %s12 = ssub.s32 1, %s10
  %s13 = scalar_select 0, %s12, %s10
  // Predicated region
  $region2: #{tpu_custom_call.1} parent=0 // pred_check
    _
  $region3: #{tpu_custom_call.1} parent=0 // pred_check_branch
    %15 = sbr.rel (0) target = $region5
  $region4: #{tpu_custom_call.1} parent=0 // pred_region
    _
  $region5: #{tpu_custom_call.1} parent=0 // pred_fallthru
    _
  // Predicated region
  $region6: #{tpu_custom_call.1} parent=0 // pred_check
    _
  $region7: #{tpu_custom_call.1} parent=0 // pred_check_branch
    %17 = sbr.rel (0) target = $region9
  $region8: #{tpu_custom_call.1} parent=0 // pred_region
    _
  $region9: #{tpu_custom_call.1} parent=0 // pred_fallthru
    _
  // Predicated region
  $region10: #{tpu_custom_call.1} parent=0 // pred_check
    _
  $region11: #{tpu_custom_call.1} parent=0 // pred_check_branch
    %19 = sbr.rel (0) target = $region13
  $region12: #{tpu_custom_call.1} parent=0 // pred_region
    _
  $region13: #{tpu_custom_call.1} parent=0 // pred_fallthru
    _
  // Predicated region
  $region14: #{tpu_custom_call.1} parent=0 // pred_check
    _
  $region15: #{tpu_custom_call.1} parent=0 // pred_check_branch
    %21 = sbr.rel (0) target = $region17
  $region16: #{tpu_custom_call.1} parent=0 // pred_region
    _
  $region17: #{tpu_custom_call.1} parent=0 // pred_fallthru
    _
  // Predicated region
  $region18: #{tpu_custom_call.1} parent=0 // pred_check
    _
  $region19: #{tpu_custom_call.1} parent=0 // pred_check_branch
    %23 = sbr.rel (0) target = $region21
  $region20: #{tpu_custom_call.1} parent=0 // pred_region
    _
  $region21: #{tpu_custom_call.1} parent=0 // pred_fallthru
    _
  // Predicated region
  $region22: #{tpu_custom_call.1} parent=0 // pred_check
    _
  $region23: #{tpu_custom_call.1} parent=0 // pred_check_branch
    %25 = sbr.rel (0) target = $region25
  $region24: #{tpu_custom_call.1} parent=0 // pred_region
    _
  $region25: #{tpu_custom_call.1} parent=0 // pred_fallthru
    _
  // Predicated region
  $region26: #{tpu_custom_call.1} parent=0 // pred_check
    _
  $region27: #{tpu_custom_call.1} parent=0 // pred_check_branch
    %27 = sbr.rel (0) target = $region29
  $region28: #{tpu_custom_call.1} parent=0 // pred_region
    _
  $region29: #{tpu_custom_call.1} parent=0 // pred_fallthru
    _
  // Predicated region
  $region30: #{tpu_custom_call.1} parent=0 // pred_check
    _
  $region31: #{tpu_custom_call.1} parent=0 // pred_check_branch
    %29 = sbr.rel (0) target = $region33
  $region32: #{tpu_custom_call.1} parent=0 // pred_region
    _
  $region33: #{tpu_custom_call.1} parent=0 // pred_fallthru
    _
  // Predicated region
  $region34: #{tpu_custom_call.1} parent=0 // pred_check
    _
  $region35: #{tpu_custom_call.1} parent=0 // pred_check_branch
    %31 = sbr.rel (0) target = $region37
  $region36: #{tpu_custom_call.1} parent=0 // pred_region
    _
  $region37: #{tpu_custom_call.1} parent=0 // pred_fallthru
    _
  %v32 = vld [vmem:[%s0] sm:$0xff]
  %v33 = vld [vmem:[%s0 + $0x8] sm:$0xff]
  %v34 = vld [vmem:[%s1] sm:$0xff]
  %v35 = vld [vmem:[%s1 + $0x8] sm:$0xff]
  %v36 = vld [vmem:[%s1 + $0x10] sm:$0xff]
  %v37 = vld [vmem:[%s1 + $0x18] sm:$0xff]
  %v38 = vld [vmem:[%s2] sm:$0x1]
  %v39 = vld [vmem:[%s3] sm:$0x1]
  %vm40 = vcmask 261120
  %v42 = vsel %vm40, %v32, 0
  %v45 = vsel %vm40, %v33, 0
  %47 = vmatprep.subr.mxu0 0.0
  %48 = vmatpush1.msra.mxu0 %v34
  %49 = vmatprep.subr.mxu0 0.0
  %50 = vmatpush1.msra.mxu0 %v35
  %51 = vmatprep.subr.mxu0 0.0
  %52 = vmatpush1.msra.mxu0 %v36
  %53 = vmatprep.subr.mxu0 0.0
  %54 = vmatpush1.msra.mxu0 %v37
  %55 = vmatprep.subr.mxu0 0.0
  %56 = vmatpush1.msra.mxu0 0.0
  %57 = vmatprep.subr.mxu0 0.0
  %58 = vmatpush1.msra.mxu0 0.0
  %59 = vmatprep.subr.mxu0 0.0
  %60 = vmatpush1.msra.mxu0 0.0
  %61 = vmatprep.subr.mxu0 0.0
  %62 = vmatpush1.msra.mxu0 0.0
  %63 = vmatprep.subr.mxu0 0.0
  %64 = vmatpush1.msra.mxu0 0.0
  %65 = vmatprep.subr.mxu0 0.0
  %66 = vmatpush1.msra.mxu0 0.0
  %67 = vmatprep.subr.mxu0 0.0
  %68 = vmatpush1.msra.mxu0 0.0
  %69 = vmatprep.subr.mxu0 0.0
  %70 = vmatpush1.msra.mxu0 0.0
  %71 = vmatprep.subr.mxu0 0.0
  %72 = vmatpush1.msra.mxu0 0.0
  %73 = vmatprep.subr.mxu0 0.0
  %74 = vmatpush1.msra.mxu0 0.0
  %75 = vmatprep.subr.mxu0 0.0
  %76 = vmatpush1.msra.mxu0 0.0
  %77 = vmatprep.subr.mxu0 0.0
  %78 = vmatpush1.msra.mxu0 0.0
  %79 = vmatprep.subr.mxu0 0.0
  %80 = vmatpush1.msra.mxu0 0.0
  %81 = vmatprep.subr.mxu0 0.0
  %82 = vmatpush1.msra.mxu0 0.0
  %83 = vmatprep.subr.mxu0 0.0
  %84 = vmatpush1.msra.mxu0 0.0
  %85 = vmatprep.subr.mxu0 0.0
  %86 = vmatpush1.msra.mxu0 0.0
  %87 = vmatprep.subr.mxu0 0.0
  %88 = vmatpush1.msra.mxu0 0.0
  %89 = vmatprep.subr.mxu0 0.0
  %90 = vmatpush1.msra.mxu0 0.0
  %91 = vmatprep.subr.mxu0 0.0
  %92 = vmatpush1.msra.mxu0 0.0
  %93 = vmatprep.subr.mxu0 0.0
  %94 = vmatpush1.msra.mxu0 0.0
  %95 = vmatprep.subr.mxu0 0.0
  %96 = vmatpush1.msra.mxu0 0.0
  %97 = vmatprep.subr.mxu0 0.0
  %98 = vmatpush1.msra.mxu0 0.0
  %99 = vmatprep.subr.mxu0 0.0
  %100 = vmatpush1.msra.mxu0 0.0
  %101 = vmatprep.subr.mxu0 0.0
  %102 = vmatpush1.msra.mxu0 0.0
  %103 = vmatprep.subr.mxu0 0.0
  %104 = vmatpush1.msra.mxu0 0.0
  %105 = vmatprep.subr.mxu0 0.0
  %106 = vmatpush1.msra.mxu0 0.0
  %107 = vmatprep.subr.mxu0 0.0
  %108 = vmatpush1.msra.mxu0 0.0
  %109 = vmatprep.subr.mxu0 0.0
  %110 = vmatpush1.msra.mxu0 0.0
  %111 = vmatprep.mubr.f32.mxu0 0.0
  %112 = vmatmul.mubr.f32.gmra.mrb[0].mxu0 %v42
  %v113 = vpop.f32.mrb[0].mxu0
  %v114 = vadd.f32 0.0, %v113
  %v115 = vpop.f32.mrb[0].mxu0
  %116 = vmatprep.mubr.f32.mxu0 0.0
  %117 = vmatmul.mubr.f32.gmra.mrb[0].mxu0 %v45
  %v118 = vpop.f32.mrb[0].mxu0
  %v119 = vadd.f32 0.0, %v118
  %v120 = vpop.f32.mrb[0].mxu0
  %121 = vdwg.mxu0
  %v123 = vlaneseq
  %v124 = vshrl.u32 %v123, 7
  %v125 = vsub.s32 0, %v124
  %v126 = vrot.slane %v38, %v125
  %v128 = vmul.f32 %v114, %v126
  %v129 = vmul.f32 %v119, %v126
  %v131 = vlaneseq
  %v132 = vshrl.u32 %v131, 7
  %v133 = vsub.s32 0, %v132
  %v134 = vrot.slane %v39, %v133
  %v136 = vadd.f32 %v128, %v134
  %v137 = vadd.f32 %v129, %v134
  %v138 = vsub.f32 0.0, %v136
  %v139 = vsub.f32 0.0, %v137
  %v140 = vmul.f32 %v138, 1.442695
  %v141 = vpow.pop %v140
  %v142 = vmul.f32 %v139, 1.442695
  %v143 = vpow.pop %v142
  %v144 = vadd.f32 %v141, 1.0
  %v145 = vadd.f32 %v143, 1.0
  %v146 = vrcp.pop %v144
  %v147 = vrcp.pop %v145
  %v148 = vld [vmem:[%s4] sm:$0xff]
  %v149 = vld [vmem:[%s4 + $0x8] sm:$0xff]
  %v150 = vld [vmem:[%s4 + $0x10] sm:$0xff]
  %v151 = vld [vmem:[%s5] sm:$0x1]
  %v152 = vld [vmem:[%s6] sm:$0x1]
  %vm153 = vcmask 195584
  %v155 = vsel %vm153, %v146, 0
  %v158 = vsel %vm153, %v147, 0
  %160 = vmatprep.subr.mxu0 0.0
  %161 = vmatpush1.msra.mxu0 %v148
  %162 = vmatprep.subr.mxu0 0.0
  %163 = vmatpush1.msra.mxu0 %v149
  %164 = vmatprep.subr.mxu0 0.0
  %165 = vmatpush1.msra.mxu0 %v150
  %166 = vmatprep.subr.mxu0 0.0
  %167 = vmatpush1.msra.mxu0 0.0
  %168 = vmatprep.subr.mxu0 0.0
  %169 = vmatpush1.msra.mxu0 0.0
  %170 = vmatprep.subr.mxu0 0.0
  %171 = vmatpush1.msra.mxu0 0.0
  %172 = vmatprep.subr.mxu0 0.0
  %173 = vmatpush1.msra.mxu0 0.0
  %174 = vmatprep.subr.mxu0 0.0
  %175 = vmatpush1.msra.mxu0 0.0
  %176 = vmatprep.subr.mxu0 0.0
  %177 = vmatpush1.msra.mxu0 0.0
  %178 = vmatprep.subr.mxu0 0.0
  %179 = vmatpush1.msra.mxu0 0.0
  %180 = vmatprep.subr.mxu0 0.0
  %181 = vmatpush1.msra.mxu0 0.0
  %182 = vmatprep.subr.mxu0 0.0
  %183 = vmatpush1.msra.mxu0 0.0
  %184 = vmatprep.subr.mxu0 0.0
  %185 = vmatpush1.msra.mxu0 0.0
  %186 = vmatprep.subr.mxu0 0.0
  %187 = vmatpush1.msra.mxu0 0.0
  %188 = vmatprep.subr.mxu0 0.0
  %189 = vmatpush1.msra.mxu0 0.0
  %190 = vmatprep.subr.mxu0 0.0
  %191 = vmatpush1.msra.mxu0 0.0
  %192 = vmatprep.subr.mxu0 0.0
  %193 = vmatpush1.msra.mxu0 0.0
  %194 = vmatprep.subr.mxu0 0.0
  %195 = vmatpush1.msra.mxu0 0.0
  %196 = vmatprep.subr.mxu0 0.0
  %197 = vmatpush1.msra.mxu0 0.0
  %198 = vmatprep.subr.mxu0 0.0
  %199 = vmatpush1.msra.mxu0 0.0
  %200 = vmatprep.subr.mxu0 0.0
  %201 = vmatpush1.msra.mxu0 0.0
  %202 = vmatprep.subr.mxu0 0.0
  %203 = vmatpush1.msra.mxu0 0.0
  %204 = vmatprep.subr.mxu0 0.0
  %205 = vmatpush1.msra.mxu0 0.0
  %206 = vmatprep.subr.mxu0 0.0
  %207 = vmatpush1.msra.mxu0 0.0
  %208 = vmatprep.subr.mxu0 0.0
  %209 = vmatpush1.msra.mxu0 0.0
  %210 = vmatprep.subr.mxu0 0.0
  %211 = vmatpush1.msra.mxu0 0.0
  %212 = vmatprep.subr.mxu0 0.0
  %213 = vmatpush1.msra.mxu0 0.0
  %214 = vmatprep.subr.mxu0 0.0
  %215 = vmatpush1.msra.mxu0 0.0
  %216 = vmatprep.subr.mxu0 0.0
  %217 = vmatpush1.msra.mxu0 0.0
  %218 = vmatprep.subr.mxu0 0.0
  %219 = vmatpush1.msra.mxu0 0.0
  %220 = vmatprep.subr.mxu0 0.0
  %221 = vmatpush1.msra.mxu0 0.0
  %222 = vmatprep.subr.mxu0 0.0
  %223 = vmatpush1.msra.mxu0 0.0
  %224 = vmatprep.mubr.f32.mxu0 0.0
  %225 = vmatmul.mubr.f32.gmra.mrb[0].mxu0 %v155
  %v226 = vpop.f32.mrb[0].mxu0
  %v227 = vadd.f32 0.0, %v226
  %v228 = vpop.f32.mrb[0].mxu0
  %229 = vmatprep.mubr.f32.mxu0 0.0
  %230 = vmatmul.mubr.f32.gmra.mrb[0].mxu0 %v158
  %v231 = vpop.f32.mrb[0].mxu0
  %v232 = vadd.f32 0.0, %v231
  %v233 = vpop.f32.mrb[0].mxu0
  %234 = vdwg.mxu0
  %v236 = vlaneseq
  %v237 = vshrl.u32 %v236, 7
  %v238 = vsub.s32 0, %v237
  %v239 = vrot.slane %v151, %v238
  %v241 = vmul.f32 %v227, %v239
  %v242 = vmul.f32 %v232, %v239
  %v244 = vlaneseq
  %v245 = vshrl.u32 %v244, 7
  %v246 = vsub.s32 0, %v245
  %v247 = vrot.slane %v152, %v246
  %v249 = vadd.f32 %v241, %v247
  %v250 = vadd.f32 %v242, %v247
  %v251 = vsub.f32 0.0, %v249
  %v252 = vsub.f32 0.0, %v250
  %v253 = vmul.f32 %v251, 1.442695
  %v254 = vpow.pop %v253
  %v255 = vmul.f32 %v252, 1.442695
  %v256 = vpow.pop %v255
  %v257 = vadd.f32 %v254, 1.0
  %v258 = vadd.f32 %v256, 1.0
  %v259 = vrcp.pop %v257
  %v260 = vrcp.pop %v258
  %v261 = vld [vmem:[%s7] sm:$0xff]
  %v262 = vld [vmem:[%s7 + $0x8] sm:$0xff]
  %v263 = vld [vmem:[%s8] sm:$0x1]
  %v265 = vlaneseq
  %v266 = vshrl.u32 %v265, 7
  %v267 = vsub.s32 0, %v266
  %v268 = vrot.slane %v263, %v267
  %vm270 = vcmask 130048
  %v272 = vsel %vm270, %v259, 0
  %v275 = vsel %vm270, %v260, 0
  %277 = vmatprep.subr.mxu0 0.0
  %278 = vmatpush1.msra.mxu0 %v261
  %279 = vmatprep.subr.mxu0 0.0
  %280 = vmatpush1.msra.mxu0 %v262
  %281 = vmatprep.subr.mxu0 0.0
  %282 = vmatpush1.msra.mxu0 0.0
  %283 = vmatprep.subr.mxu0 0.0
  %284 = vmatpush1.msra.mxu0 0.0
  %285 = vmatprep.subr.mxu0 0.0
  %286 = vmatpush1.msra.mxu0 0.0
  %287 = vmatprep.subr.mxu0 0.0
  %288 = vmatpush1.msra.mxu0 0.0
  %289 = vmatprep.subr.mxu0 0.0
  %290 = vmatpush1.msra.mxu0 0.0
  %291 = vmatprep.subr.mxu0 0.0
  %292 = vmatpush1.msra.mxu0 0.0
  %293 = vmatprep.subr.mxu0 0.0
  %294 = vmatpush1.msra.mxu0 0.0
  %295 = vmatprep.subr.mxu0 0.0
  %296 = vmatpush1.msra.mxu0 0.0
  %297 = vmatprep.subr.mxu0 0.0
  %298 = vmatpush1.msra.mxu0 0.0
  %299 = vmatprep.subr.mxu0 0.0
  %300 = vmatpush1.msra.mxu0 0.0
  %301 = vmatprep.subr.mxu0 0.0
  %302 = vmatpush1.msra.mxu0 0.0
  %303 = vmatprep.subr.mxu0 0.0
  %304 = vmatpush1.msra.mxu0 0.0
  %305 = vmatprep.subr.mxu0 0.0
  %306 = vmatpush1.msra.mxu0 0.0
  %307 = vmatprep.subr.mxu0 0.0
  %308 = vmatpush1.msra.mxu0 0.0
  %309 = vmatprep.subr.mxu0 0.0
  %310 = vmatpush1.msra.mxu0 0.0
  %311 = vmatprep.subr.mxu0 0.0
  %312 = vmatpush1.msra.mxu0 0.0
  %313 = vmatprep.subr.mxu0 0.0
  %314 = vmatpush1.msra.mxu0 0.0
  %315 = vmatprep.subr.mxu0 0.0
  %316 = vmatpush1.msra.mxu0 0.0
  %317 = vmatprep.subr.mxu0 0.0
  %318 = vmatpush1.msra.mxu0 0.0
  %319 = vmatprep.subr.mxu0 0.0
  %320 = vmatpush1.msra.mxu0 0.0
  %321 = vmatprep.subr.mxu0 0.0
  %322 = vmatpush1.msra.mxu0 0.0
  %323 = vmatprep.subr.mxu0 0.0
  %324 = vmatpush1.msra.mxu0 0.0
  %325 = vmatprep.subr.mxu0 0.0
  %326 = vmatpush1.msra.mxu0 0.0
  %327 = vmatprep.subr.mxu0 0.0
  %328 = vmatpush1.msra.mxu0 0.0
  %329 = vmatprep.subr.mxu0 0.0
  %330 = vmatpush1.msra.mxu0 0.0
  %331 = vmatprep.subr.mxu0 0.0
  %332 = vmatpush1.msra.mxu0 0.0
  %333 = vmatprep.subr.mxu0 0.0
  %334 = vmatpush1.msra.mxu0 0.0
  %335 = vmatprep.subr.mxu0 0.0
  %336 = vmatpush1.msra.mxu0 0.0
  %337 = vmatprep.subr.mxu0 0.0
  %338 = vmatpush1.msra.mxu0 0.0
  %339 = vmatprep.subr.mxu0 0.0
  %340 = vmatpush1.msra.mxu0 0.0
  %341 = vmatprep.mubr.f32.mxu0 0.0
  %342 = vmatmul.mubr.f32.gmra.mrb[0].mxu0 %v272
  %v343 = vpop.f32.mrb[0].mxu0
  %v344 = vadd.f32 %v268, %v343
  %v345 = vpop.f32.mrb[0].mxu0
  %346 = vmatprep.mubr.f32.mxu0 0.0
  %347 = vmatmul.mubr.f32.gmra.mrb[0].mxu0 %v275
  %v348 = vpop.f32.mrb[0].mxu0
  %v349 = vadd.f32 %v268, %v348
  %v350 = vpop.f32.mrb[0].mxu0
  %351 = vdwg.mxu0
  %vm352 = vcmask 64512
  %353 = vst.msk [vmem:[%s9] sm:$0xff] %vm352, %v344
  %354 = vst.msk [vmem:[%s9 + $0x8] sm:$0xff] %vm352, %v349
  // Predicated region
  $region38: #{tpu_custom_call.1} parent=0 // pred_check
    _
  $region39: #{tpu_custom_call.1} parent=0 // pred_check_branch
    %356 = sbr.rel (0) target = $region41
  $region40: #{tpu_custom_call.1} parent=0 // pred_region
    _
  $region41: #{tpu_custom_call.1} parent=0 // pred_fallthru
    _
  // Predicated region
  $region42: #{tpu_custom_call.1} parent=0 // pred_check
    _
  $region43: #{tpu_custom_call.1} parent=0 // pred_check_branch
    %358 = sbr.rel (0) target = $region45
  $region44: #{tpu_custom_call.1} parent=0 // pred_region
    _
  $region45: #{tpu_custom_call.1} parent=0 // pred_fallthru
    _

</llo_original>
